<compile_context>
chip_gen: v6e
topology: v6e:2x2x1
jax: 0.10.0
libtpu: 0.0.40
codegen_flags: <defaults>
</compile_context>

<pallas_src>
import functools
import math

import jax
import jax.numpy as jnp
from jax import lax
from jax.experimental import pallas as pl
from jax.experimental.pallas import tpu as pltpu

EPS = 1e-7          # softmax clamp (matches module-level eps in the PyTorch code)
ONE_HOT_EPS = 1e-4  # clamp applied to the one-hot targets
LOG_EPS = float(math.log(EPS))


def _bootstrap_hard_kernel(pred_ref, lab_ref, out_ref, acc_ref, *,
                           beta, n_valid, tiles_per_split):
    p = pl.program_id(0)   # parallel split (megacore)
    i = pl.program_id(1)   # reduction over row tiles

    @pl.when(i == 0)
    def _():
        acc_ref[...] = jnp.zeros_like(acc_ref)

    logits = pred_ref[...].astype(jnp.float32)               # (T, C)
    t, c = logits.shape

    # Numerically stable log-softmax over the class (lane) axis.
    m = jnp.max(logits, axis=-1, keepdims=True)               # (T, 1)
    shifted = logits - m
    log_sum_e = jnp.log(jnp.sum(jnp.exp(shifted), axis=-1, keepdims=True))
    log_eps = jnp.float32(LOG_EPS)
    # log(clamp(softmax, EPS, 1)) == max(log_softmax, log(EPS))   (p <= 1)
    logp = jnp.maximum(shifted - log_sum_e, log_eps)           # (T, C)

    # Closed-form pieces of the bootstrapped cross-entropy:
    #   sum_c(logp), logp at the label, logp at the argmax (= max_c(logp)).
    sum_logp = jnp.sum(logp, axis=-1, keepdims=True)           # (T, 1)
    logp_max = jnp.maximum(-log_sum_e, log_eps)                # (T, 1)

    lab = lab_ref[...]                                         # (T, 1) int32
    iota_c = lax.broadcasted_iota(jnp.int32, (t, c), 1)
    logp_lab = jnp.sum(jnp.where(iota_c == lab, logp, 0.0),
                       axis=-1, keepdims=True)                 # (T, 1)

    # clamp(one_hot, 1e-4, 1) == 1e-4 + (1 - 1e-4) * one_hot, hence:
    row_loss = -(ONE_HOT_EPS * sum_logp
                 + (1.0 - ONE_HOT_EPS)
                 * (beta * logp_lab + (1.0 - beta) * logp_max))  # (T, 1)

    # Mask rows past the true N (partial last block / redundant clamped tiles).
    row0 = (p * tiles_per_split + i) * t
    row_ids = row0 + lax.broadcasted_iota(jnp.int32, (t, 1), 0)
    row_loss = jnp.where(row_ids < n_valid, row_loss, 0.0)      # select kills NaN

    acc_ref[...] += jnp.sum(row_loss, axis=0, keepdims=True)    # (1, 1)

    @pl.when(i == pl.num_programs(1) - 1)
    def _():
        out_ref[...] = jnp.broadcast_to(acc_ref[...], out_ref.shape)


def _auto_tile_n(n, c, itemsize):
    """Pick a row-tile: ~2 MiB of f32 lane-padded working set per tile."""
    lane_c = ((max(c, 128) + 127) // 128) * 128
    row_align = 8 if itemsize >= 4 else (16 if itemsize == 2 else 32)
    budget = 2 << 20                      # per-tile f32 footprint target
    tile = budget // (lane_c * 4)
    tile = max(row_align, (tile // row_align) * row_align)
    tile = min(tile, 8192)
    # No point in a tile larger than the (row-aligned) problem.
    tile = min(tile, max(row_align, ((n + row_align - 1) // row_align) * row_align))
    return tile


def bootstrapping_hard_loss(y_pred, labels, *, beta=0.8, tile_n=None):
    """y_pred: (N, C) float logits (f32 or bf16); labels: (N,) int class ids.

    Returns a scalar f32 loss.  Pass bf16 logits when the producer allows it:
    the kernel upcasts to f32 internally, so only HBM traffic is halved.
    """
    n, c = y_pred.shape
    itemsize = jnp.dtype(y_pred.dtype).itemsize
    row_align = 8 if itemsize >= 4 else (16 if itemsize == 2 else 32)

    if tile_n is None:
        tile_n = _auto_tile_n(n, c, itemsize)
    else:
        tile_n = max(row_align, (int(tile_n) // row_align) * row_align)

    n_tiles = pl.cdiv(n, tile_n)
    num_splits = 2 if n_tiles >= 2 else 1          # feeds both TCs on v7x
    tiles_per_split = pl.cdiv(n_tiles, num_splits)

    labels2d = labels.astype(jnp.int32).reshape(n, 1)

    # Clamp the global tile index so redundant tail tiles (uneven split) stay
    # in bounds; their rows are discarded by the row_ids mask in the kernel.
    def tile_map(p, i):
        return (jnp.minimum(p * tiles_per_split + i, n_tiles - 1), 0)

    kernel = functools.partial(
        _bootstrap_hard_kernel,
        beta=float(beta), n_valid=n, tiles_per_split=tiles_per_split)

    partial_sums = pl.pallas_call(
        kernel,
        out_shape=jax.ShapeDtypeStruct((num_splits, 8, 128), jnp.float32),
        grid_spec=pltpu.PrefetchScalarGridSpec(
            num_scalar_prefetch=0,
            grid=(num_splits, tiles_per_split),
            in_specs=[
                pl.BlockSpec((tile_n, c), tile_map),   # logits tile
                pl.BlockSpec((tile_n, 1), tile_map),   # labels tile
            ],
            # One (8,128)-padded partial-sum block per split (disjoint HBM tiles).
            out_specs=pl.BlockSpec((None, 8, 128), lambda p, i: (p, 0, 0)),
            scratch_shapes=[pltpu.VMEM((1, 1), jnp.float32)],
        ),
        compiler_params=pltpu.CompilerParams(
            dimension_semantics=("parallel", "arbitrary"),
            vmem_limit_bytes=32 * 1024 * 1024,         # safe on v5e/v6e/v7x
        ),
    )(y_pred, labels2d)

    return jnp.sum(partial_sums[:, 0, 0]) / jnp.float32(n)


def bootstrapping_hard_ref(y_pred, labels, num_classes, beta=0.8):
    """Pure-JAX reference mirroring the PyTorch forward."""
    p = jnp.clip(jax.nn.softmax(y_pred.astype(jnp.float32), axis=1), EPS, 1.0)
    lab_oh = jnp.clip(jax.nn.one_hot(labels, num_classes, dtype=jnp.float32),
                      ONE_HOT_EPS, 1.0)
    pred_oh = jnp.clip(jax.nn.one_hot(jnp.argmax(p, axis=1), num_classes,
                                      dtype=jnp.float32), ONE_HOT_EPS, 1.0)
    mix = beta * lab_oh + (1.0 - beta) * pred_oh
    return jnp.mean(-jnp.sum(mix * jnp.log(p), axis=-1))


if __name__ == "__main__":
    num_classes = 10
    beta = 0.8
    n = 37  # deliberately NOT a multiple of 8 / tile -> exercises no-pad tail masking

    key = jax.random.PRNGKey(0)
    k_pred, k_lab = jax.random.split(key)
    y_pred = jax.random.normal(k_pred, (n, num_classes), dtype=jnp.float32)
    labels = jax.random.randint(k_lab, (n,), 0, num_classes, dtype=jnp.int32)

    ref = bootstrapping_hard_ref(y_pred, labels, num_classes, beta=beta)

    # 1) Small tiles -> multi-step reduction grid + 2-way parallel split,
    #    partial last block, clamped redundant tile.
    loss = bootstrapping_hard_loss(y_pred, labels, beta=beta, tile_n=8)
    jax.block_until_ready(loss)
    assert jnp.allclose(loss, ref, rtol=1e-5, atol=1e-6), (float(loss), float(ref))

    # 2) Auto-sized tiles (single big tile here).
    loss2 = bootstrapping_hard_loss(y_pred, labels, beta=beta)
    jax.block_until_ready(loss2)
    assert jnp.allclose(loss2, ref, rtol=1e-5, atol=1e-6), (float(loss2), float(ref))

    # 3) bf16 logits path (HBM-traffic halving); compare against the f32 ref
    #    evaluated on the same rounded inputs.
    y_bf16 = y_pred.astype(jnp.bfloat16)
    ref_bf16 = bootstrapping_hard_ref(y_bf16.astype(jnp.float32), labels,
                                      num_classes, beta=beta)
    loss3 = bootstrapping_hard_loss(y_bf16, labels, beta=beta)
    jax.block_until_ready(loss3)
    assert jnp.allclose(loss3, ref_bf16, rtol=1e-5, atol=1e-5), (float(loss3),
                                                                 float(ref_bf16))

    print("KERNEL_OK")
</pallas_src>

<mosaic_0001>
module attributes {stable_mosaic.version = 11 : i64} {
  func.func @_bootstrap_hard_kernel(%arg0: i32, %arg1: i32, %arg2: memref<8x10xf32, #tpu.memory_space<vmem>>, %arg3: memref<8x1xi32, #tpu.memory_space<vmem>>, %arg4: memref<1x8x128xf32, #tpu.memory_space<vmem>>, %arg5: memref<1x1xf32, #tpu.memory_space<vmem>>) attributes {dimension_semantics = [#tpu.dimension_semantics<parallel>, #tpu.dimension_semantics<arbitrary>], iteration_bounds = array<i64: 2, 3>, scalar_prefetch = 0 : i64, scratch_operands = 1 : i64, tpu.core_type = #tpu.core_type<tc>, window_params = [{transform_indices = @transform_0, window_bounds = array<i64: 8, 10>}, {transform_indices = @transform_1, window_bounds = array<i64: 8, 1>}, {transform_indices = @transform_2, window_bounds = array<i64: 1, 8, 128>}]} {
    %c0_i32 = arith.constant 0 : i32
    %0 = arith.cmpi eq, %arg1, %c0_i32 : i32
    %1 = arith.extui %0 : i1 to i32
    %c0_i32_0 = arith.constant 0 : i32
    %2 = arith.cmpi ne, %1, %c0_i32_0 : i32
    scf.if %2 {
      %cst_23 = arith.constant 0.000000e+00 : f32
      %60 = vector.broadcast %cst_23 : f32 to vector<1x1xf32>
      %c0_24 = arith.constant 0 : index
      %c0_25 = arith.constant 0 : index
      %61 = vector.load %arg5[%c0_24, %c0_25] : memref<1x1xf32, #tpu.memory_space<vmem>>, vector<1x1xf32>
      tpu.vector_store %arg5[%c0_24, %c0_25], %60 {strides = array<i32>} : memref<1x1xf32, #tpu.memory_space<vmem>>, vector<1x1xf32>,
    } else {
    }
    %c0 = arith.constant 0 : index
    %c0_1 = arith.constant 0 : index
    %3 = vector.load %arg2[%c0, %c0_1] : memref<8x10xf32, #tpu.memory_space<vmem>>, vector<8x10xf32>
    %cst = arith.constant dense<0xFF800000> : vector<8xf32>
    %4 = vector.multi_reduction <maximumf>, %3, %cst [1] : vector<8x10xf32> to vector<8xf32>
    %5 = vector.shape_cast %4 : vector<8xf32> to vector<8x1xf32>
    %6 = vector.broadcast %5 : vector<8x1xf32> to vector<8x10xf32>
    %7 = arith.subf %3, %6 : vector<8x10xf32>
    %8 = math.exp %7 : vector<8x10xf32>
    %cst_2 = arith.constant dense<0.000000e+00> : vector<8xf32>
    %9 = vector.multi_reduction <add>, %8, %cst_2 [1] : vector<8x10xf32> to vector<8xf32>
    %10 = vector.shape_cast %9 : vector<8xf32> to vector<8x1xf32>
    %11 = math.log %10 : vector<8x1xf32>
    %12 = vector.broadcast %11 : vector<8x1xf32> to vector<8x10xf32>
    %13 = arith.subf %7, %12 : vector<8x10xf32>
    %cst_3 = arith.constant -16.1180954 : f32
    %14 = vector.broadcast %cst_3 : f32 to vector<8x10xf32>
    %15 = arith.maximumf %13, %14 : vector<8x10xf32>
    %cst_4 = arith.constant dense<0.000000e+00> : vector<8xf32>
    %16 = vector.multi_reduction <add>, %15, %cst_4 [1] : vector<8x10xf32> to vector<8xf32>
    %17 = vector.shape_cast %16 : vector<8xf32> to vector<8x1xf32>
    %cst_5 = arith.constant 0.000000e+00 : f32
    %18 = vector.broadcast %cst_5 : f32 to vector<8x1xf32>
    %19 = arith.subf %18, %11 : vector<8x1xf32>
    %cst_6 = arith.constant -16.1180954 : f32
    %20 = vector.broadcast %cst_6 : f32 to vector<8x1xf32>
    %21 = arith.maximumf %19, %20 : vector<8x1xf32>
    %c0_7 = arith.constant 0 : index
    %c0_8 = arith.constant 0 : index
    %22 = vector.load %arg3[%c0_7, %c0_8] : memref<8x1xi32, #tpu.memory_space<vmem>>, vector<8x1xi32>
    %23 = tpu.iota {dimensions = array<i32: 1>} : vector<8x10xi32>
    %24 = vector.broadcast %22 : vector<8x1xi32> to vector<8x10xi32>
    %25 = arith.cmpi eq, %23, %24 : vector<8x10xi32>
    %cst_9 = arith.constant 0.000000e+00 : f32
    %26 = vector.broadcast %cst_9 : f32 to vector<8x10xf32>
    %27 = arith.select %25, %15, %26 : vector<8x10xi1>, vector<8x10xf32>
    %cst_10 = arith.constant dense<0.000000e+00> : vector<8xf32>
    %28 = vector.multi_reduction <add>, %27, %cst_10 [1] : vector<8x10xf32> to vector<8xf32>
    %29 = vector.shape_cast %28 : vector<8xf32> to vector<8x1xf32>
    %cst_11 = arith.constant 9.99999974E-5 : f32
    %30 = vector.broadcast %cst_11 : f32 to vector<8x1xf32>
    %31 = arith.mulf %30, %17 : vector<8x1xf32>
    %cst_12 = arith.constant 8.000000e-01 : f32
    %32 = vector.broadcast %cst_12 : f32 to vector<8x1xf32>
    %33 = arith.mulf %32, %29 : vector<8x1xf32>
    %cst_13 = arith.constant 2.000000e-01 : f32
    %34 = vector.broadcast %cst_13 : f32 to vector<8x1xf32>
    %35 = arith.mulf %34, %21 : vector<8x1xf32>
    %36 = arith.addf %33, %35 : vector<8x1xf32>
    %cst_14 = arith.constant 0.999899983 : f32
    %37 = vector.broadcast %cst_14 : f32 to vector<8x1xf32>
    %38 = arith.mulf %37, %36 : vector<8x1xf32>
    %39 = arith.addf %31, %38 : vector<8x1xf32>
    %cst_15 = arith.constant 0.000000e+00 : f32
    %40 = vector.broadcast %cst_15 : f32 to vector<8x1xf32>
    %41 = arith.subf %40, %39 : vector<8x1xf32>
    %c3_i32 = arith.constant 3 : i32
    %42 = arith.muli %arg0, %c3_i32 : i32
    %43 = arith.addi %42, %arg1 : i32
    %c8_i32 = arith.constant 8 : i32
    %44 = arith.muli %43, %c8_i32 : i32
    %45 = tpu.iota {dimensions = array<i32: 0>} : vector<8x1xi32>
    %46 = vector.broadcast %44 : i32 to vector<8x1xi32>
    %47 = arith.addi %46, %45 : vector<8x1xi32>
    %c37_i32 = arith.constant 37 : i32
    %48 = vector.broadcast %c37_i32 : i32 to vector<8x1xi32>
    %49 = arith.cmpi slt, %47, %48 : vector<8x1xi32>
    %cst_16 = arith.constant 0.000000e+00 : f32
    %50 = vector.broadcast %cst_16 : f32 to vector<8x1xf32>
    %51 = arith.select %49, %41, %50 : vector<8x1xi1>, vector<8x1xf32>
    %c0_17 = arith.constant 0 : index
    %c0_18 = arith.constant 0 : index
    %52 = vector.load %arg5[%c0_17, %c0_18] : memref<1x1xf32, #tpu.memory_space<vmem>>, vector<1x1xf32>
    %cst_19 = arith.constant dense<0.000000e+00> : vector<1xf32>
    %53 = vector.multi_reduction <add>, %51, %cst_19 [0] : vector<8x1xf32> to vector<1xf32>
    %54 = vector.shape_cast %53 : vector<1xf32> to vector<1x1xf32>
    %55 = arith.addf %52, %54 : vector<1x1xf32>
    %c0_20 = arith.constant 0 : index
    %c0_21 = arith.constant 0 : index
    %56 = vector.load %arg5[%c0_20, %c0_21] : memref<1x1xf32, #tpu.memory_space<vmem>>, vector<1x1xf32>
    tpu.vector_store %arg5[%c0_20, %c0_21], %55 {strides = array<i32>} : memref<1x1xf32, #tpu.memory_space<vmem>>, vector<1x1xf32>,
    %c2_i32 = arith.constant 2 : i32
    %57 = arith.cmpi eq, %arg1, %c2_i32 : i32
    %58 = arith.extui %57 : i1 to i32
    %c0_i32_22 = arith.constant 0 : i32
    %59 = arith.cmpi ne, %58, %c0_i32_22 : i32
    scf.if %59 {
      %c0_23 = arith.constant 0 : index
      %c0_24 = arith.constant 0 : index
      %60 = vector.load %arg5[%c0_23, %c0_24] : memref<1x1xf32, #tpu.memory_space<vmem>>, vector<1x1xf32>
      %61 = vector.shape_cast %60 : vector<1x1xf32> to vector<1x1xf32>
      %62 = vector.broadcast %61 : vector<1x1xf32> to vector<8x128xf32>
      %c0_25 = arith.constant 0 : index
      %c0_26 = arith.constant 0 : index
      %c0_27 = arith.constant 0 : index
      %63 = vector.load %arg4[%c0_25, %c0_26, %c0_27] : memref<1x8x128xf32, #tpu.memory_space<vmem>>, vector<1x8x128xf32>
      %64 = vector.shape_cast %63 : vector<1x8x128xf32> to vector<8x128xf32>
      %65 = vector.shape_cast %62 : vector<8x128xf32> to vector<1x8x128xf32>
      tpu.vector_store %arg4[%c0_25, %c0_26, %c0_27], %65 {strides = array<i32>} : memref<1x8x128xf32, #tpu.memory_space<vmem>>, vector<1x8x128xf32>,
    } else {
    }
    return
  }
  func.func @transform_0(%arg0: i32, %arg1: i32) -> (i32, i32) {
    %c3_i32 = arith.constant 3 : i32
    %0 = arith.muli %arg0, %c3_i32 : i32
    %1 = arith.addi %0, %arg1 : i32
    %c4_i32 = arith.constant 4 : i32
    %2 = arith.minsi %1, %c4_i32 : i32
    %c0_i32 = arith.constant 0 : i32
    %c0_i32_0 = arith.constant 0 : i32
    return %2, %c0_i32 : i32, i32
  }
  func.func @transform_1(%arg0: i32, %arg1: i32) -> (i32, i32) {
    %c3_i32 = arith.constant 3 : i32
    %0 = arith.muli %arg0, %c3_i32 : i32
    %1 = arith.addi %0, %arg1 : i32
    %c4_i32 = arith.constant 4 : i32
    %2 = arith.minsi %1, %c4_i32 : i32
    %c0_i32 = arith.constant 0 : i32
    %c0_i32_0 = arith.constant 0 : i32
    return %2, %c0_i32 : i32, i32
  }
  func.func @transform_2(%arg0: i32, %arg1: i32) -> (i32, i32, i32) {
    %c0_i32 = arith.constant 0 : i32
    %c0_i32_0 = arith.constant 0 : i32
    %c0_i32_1 = arith.constant 0 : i32
    return %arg0, %c0_i32, %c0_i32_0 : i32, i32, i32
  }
}

</mosaic_0001>

<llo_original>
// kernel: tpu_custom_call.1
$region0: #{tpu_custom_call.1}
  #allocation0 [shape = 'u32[]', space=smem, size = 0x4, offset = 0x4, fixed_abs, tag = 'smem constant byte address 0x4 - core index']
  #allocation1 [shape = 'u32[144,128]{1,0:T(1,128)}', space=vmem, size = 0x12000, scoped, tag = 'internal scratch']
  #allocation2 [shape = 'f32[1,1]{1,0:T(1,128)}', space=vmem, size = 0x200, scoped, tag = 'scratch operand']
  %s0 = inlined_call_operand.vmem [shape: f32[37,10], index: 0, kind: input, shape index: {}]
  %s1 = inlined_call_operand.vmem [shape: s32[37,1], index: 1, kind: input, shape index: {}]
  %s2 = inlined_call_operand.hbm [shape: f32[2,8,128], index: 2, kind: output, shape index: {}]
  %s3 = sld [smem:[#allocation0]]
  $region49: #{tpu_custom_call.1} parent=0
    _
  %s5 = ssub.s32 1, %s3
  %s6 = scalar_select 0, %s5, %s3
  $region1: #{tpu_custom_call.1} parent=0
    #allocation3 [shape = 'u8[8192]{0}', space=vmem, size = 0x2000, scoped, tag = 'output window, operand 0']
    #allocation4 [shape = 's32[2]{0}', space=sflag, size = 0x8, scoped, tag = 'scoped memory for tpu_custom_call.1']
    %7 = vsyncpa [#allocation4], 0
    %s8 = scalar_lea.sflag [#allocation4], 1
    %9 = vsyncpa %s8, 0
    loop: start=0, step=1, limit=8
    $region2: #{tpu_custom_call.1} parent=1 // loop_pre_header
      _
    $region3: #{tpu_custom_call.1} parent=1 // loop_header
      %s11 = sphi 0, %s15
      %p12 = scmp.ge.s32.totalorder %s11, 8
      %s18 = sphi 0, %s30
      %s19 = sphi 0, %s26
      %s20 = sphi 0, %s18
      %s21 = sphi 0, %s19
      %s22 = sphi 0, %s20
      %s23 = sphi 0, %s21
      %s41 = sphi 0, %s43
      %s44 = sphi 0, %s41
      %s45 = sphi 0, %s44
      %s61 = sphi 0, %s45
      %s75 = sphi 0, %s77
      %s78 = sphi 0, %s75
      %s79 = sphi 0, %s78
      %s95 = sphi 0, %s79
      %s101 = sphi 0, %s103
      %s104 = sphi 0, %s101
      %s105 = sphi 0, %s104
      %s121 = sphi 0, %s105
    $region4: #{tpu_custom_call.1} parent=1 // loop_header_branch
      %14 = sbr.rel (%p12) target = $region8
    $region5: #{tpu_custom_call.1} parent=1 // loop_body
      %s16 = ssub.s32 %s11, 1
      %s17 = ssub.s32 %s11, 2
      %s24 = sadd.s32 1, %s19
      %p25 = scmp.ge.s32.totalorder %s24, 3
      %s26 = scalar_select %p25, 0, %s24
      %s27 = sadd.s32 1, %s18
      %s28 = scalar_select %p25, %s27, %s18
      %p29 = scmp.ge.s32.totalorder %s28, 2
      %s30 = scalar_select %p29, 0, %s28
      %s31 = smul.u32 %s18, 3
      %s32 = sadd.s32 %s31, %s19
      %p33 = scmp.lt.s32.totalorder %s32, 4
      %s34 = scalar_select %p33, %s32, 4
      %s35 = smul.u32 %s30, 3
      %s36 = sadd.s32 %s35, %s26
      %p37 = scmp.lt.s32.totalorder %s36, 4
      %s38 = scalar_select %p37, %s36, 4
      %s39 = ssub.s32 %s34, %s38
      %p40 = scmp.eq.s32.totalorder %s39, 0
      %s42 = sadd.s32 %s41, 1
      %s43 = scalar_select %p40, %s41, %s42
      %p46 = pneg %p40
      %p47 = scmp.eq.s32.totalorder %s11, 5
      %p48 = por %p46, %p47
      %p49 = scmp.ne.s32.totalorder %s41, %s44
      %p50 = scmp.eq.s32.totalorder %s11, 0
      %p51 = por %p49, %p50
      %p52 = scmp.ne.s32.totalorder %s41, %s44
      %p53 = scmp.eq.s32.totalorder %s16, 5
      %p54 = por %p52, %p53
      %p55 = scmp.ne.s32.totalorder %s44, %s45
      %p56 = scmp.eq.s32.totalorder %s16, 0
      %p57 = por %p55, %p56
      %p58 = scmp.ne.s32.totalorder %s44, %s45
      %p59 = scmp.eq.s32.totalorder %s17, 5
      %p60 = por %p58, %p59
      %p62 = scmp.ne.s32.totalorder %s45, %s61
      %p63 = scmp.eq.s32.totalorder %s17, 0
      %p64 = por %p62, %p63
      %s65 = smul.u32 %s18, 3
      %s66 = sadd.s32 %s65, %s19
      %p67 = scmp.lt.s32.totalorder %s66, 4
      %s68 = scalar_select %p67, %s66, 4
      %s69 = smul.u32 %s30, 3
      %s70 = sadd.s32 %s69, %s26
      %p71 = scmp.lt.s32.totalorder %s70, 4
      %s72 = scalar_select %p71, %s70, 4
      %s73 = ssub.s32 %s68, %s72
      %p74 = scmp.eq.s32.totalorder %s73, 0
      %s76 = sadd.s32 %s75, 1
      %s77 = scalar_select %p74, %s75, %s76
      %p80 = pneg %p74
      %p81 = scmp.eq.s32.totalorder %s11, 5
      %p82 = por %p80, %p81
      %p83 = scmp.ne.s32.totalorder %s75, %s78
      %p84 = scmp.eq.s32.totalorder %s11, 0
      %p85 = por %p83, %p84
      %p86 = scmp.ne.s32.totalorder %s75, %s78
      %p87 = scmp.eq.s32.totalorder %s16, 5
      %p88 = por %p86, %p87
      %p89 = scmp.ne.s32.totalorder %s78, %s79
      %p90 = scmp.eq.s32.totalorder %s16, 0
      %p91 = por %p89, %p90
      %p92 = scmp.ne.s32.totalorder %s78, %s79
      %p93 = scmp.eq.s32.totalorder %s17, 5
      %p94 = por %p92, %p93
      %p96 = scmp.ne.s32.totalorder %s79, %s95
      %p97 = scmp.eq.s32.totalorder %s17, 0
      %p98 = por %p96, %p97
      %s99 = ssub.s32 %s18, %s30
      %p100 = scmp.eq.s32.totalorder %s99, 0
      %s102 = sadd.s32 %s101, 1
      %s103 = scalar_select %p100, %s101, %s102
      %p106 = pneg %p100
      %p107 = scmp.eq.s32.totalorder %s11, 5
      %p108 = por %p106, %p107
      %p109 = scmp.ne.s32.totalorder %s101, %s104
      %p110 = scmp.eq.s32.totalorder %s11, 0
      %p111 = por %p109, %p110
      %p112 = scmp.ne.s32.totalorder %s101, %s104
      %p113 = scmp.eq.s32.totalorder %s16, 5
      %p114 = por %p112, %p113
      %p115 = scmp.ne.s32.totalorder %s104, %s105
      %p116 = scmp.eq.s32.totalorder %s16, 0
      %p117 = por %p115, %p116
      %p118 = scmp.ne.s32.totalorder %s104, %s105
      %p119 = scmp.eq.s32.totalorder %s17, 5
      %p120 = por %p118, %p119
      %p122 = scmp.ne.s32.totalorder %s105, %s121
      %p123 = scmp.eq.s32.totalorder %s17, 0
      %p124 = por %p122, %p123
      %p125 = scmp.le.s32.totalorder 1, %s11
      %p126 = scmp.lt.s32.totalorder %s11, 7
      %p127 = pnand %p125, %p126
      %p128 = pneg %p127
      // Predicated region
      $region9: #{tpu_custom_call.1} parent=5 // pred_check
        _
      $region10: #{tpu_custom_call.1} parent=5 // pred_check_branch
        %130 = sbr.rel (%p127) target = $region12
      $region11: #{tpu_custom_call.1} parent=5 // pred_region
        %s131 = ssub.s32 %s11, 1
      $region12: #{tpu_custom_call.1} parent=5 // pred_fallthru
        _
      %p132 = scmp.lt.s32.totalorder %s11, 6
      // Predicated region
      $region13: #{tpu_custom_call.1} parent=5 // pred_check
        %p133 = pneg %p132
      $region14: #{tpu_custom_call.1} parent=5 // pred_check_branch
        %135 = sbr.rel (%p133) target = $region16
      $region15: #{tpu_custom_call.1} parent=5 // pred_region
        // Predicated region
        $region17: #{tpu_custom_call.1} parent=15 // pred_check
          %p136 = pneg %p51
        $region18: #{tpu_custom_call.1} parent=15 // pred_check_branch
          %138 = sbr.rel (%p136) target = $region20
        $region19: #{tpu_custom_call.1} parent=15 // pred_region
          %s139 = smul.u32 %s18, 3
          %s140 = sadd.s32 %s139, %s19
          %p141 = scmp.lt.s32.totalorder %s140, 4
          %s142 = scalar_select %p141, %s140, 4
          %p143 = scmp.lt.s32.totalorder %s142, 4
          %s144 = scalar_select %p143, %s142, 4
          %s145 = smul.addr %s144, 8
          %s146 = scalar_lea.vmem %s0, %s145
          %s147 = smul.u32 %s18, 3
          %s148 = sadd.s32 %s147, %s19
          %p149 = scmp.lt.s32.totalorder %s148, 4
          %s150 = scalar_select %p149, %s148, 4
        $region20: #{tpu_custom_call.1} parent=15 // pred_fallthru
          _
        // Predicated region
        $region21: #{tpu_custom_call.1} parent=15 // pred_check
          %p151 = pneg %p85
        $region22: #{tpu_custom_call.1} parent=15 // pred_check_branch
          %153 = sbr.rel (%p151) target = $region24
        $region23: #{tpu_custom_call.1} parent=15 // pred_region
          %s154 = smul.u32 %s18, 3
          %s155 = sadd.s32 %s154, %s19
          %p156 = scmp.lt.s32.totalorder %s155, 4
          %s157 = scalar_select %p156, %s155, 4
          %p158 = scmp.lt.s32.totalorder %s157, 4
          %s159 = scalar_select %p158, %s157, 4
          %s160 = smul.addr %s159, 8
          %s161 = scalar_lea.vmem %s1, %s160
          %s162 = smul.u32 %s18, 3
          %s163 = sadd.s32 %s162, %s19
          %p164 = scmp.lt.s32.totalorder %s163, 4
          %s165 = scalar_select %p164, %s163, 4
        $region24: #{tpu_custom_call.1} parent=15 // pred_fallthru
          _
      $region16: #{tpu_custom_call.1} parent=5 // pred_fallthru
        _
      %p166 = scmp.le.s32.totalorder 1, %s11
      %p167 = scmp.lt.s32.totalorder %s11, 7
      %p168 = pnand %p166, %p167
      %p169 = pneg %p168
      // Predicated region
      $region25: #{tpu_custom_call.1} parent=5 // pred_check
        _
      $region26: #{tpu_custom_call.1} parent=5 // pred_check_branch
        %171 = sbr.rel (%p168) target = $region28
      $region27: #{tpu_custom_call.1} parent=5 // pred_region
        %s172 = ssub.s32 %s11, 1
        %s173 = smul.u32 %s20, 3
        %s174 = sadd.s32 %s173, %s21
        %p175 = scmp.lt.s32.totalorder %s174, 4
        %s176 = scalar_select %p175, %s174, 4
        %p177 = scmp.lt.s32.totalorder %s176, 4
        %s178 = scalar_select %p177, %s176, 4
        %s179 = smul.addr %s178, 8
        %s180 = scalar_lea.vmem %s0, %s179
        %p181 = pneg %p57
        %p182 = pneg %p54
        %s183 = smul.u32 %s20, 3
        %s184 = sadd.s32 %s183, %s21
        %p185 = scmp.lt.s32.totalorder %s184, 4
        %s186 = scalar_select %p185, %s184, 4
        %p187 = scmp.lt.s32.totalorder %s186, 4
        %s188 = scalar_select %p187, %s186, 4
        %s189 = smul.addr %s188, 8
        %s190 = scalar_lea.vmem %s1, %s189
        %p191 = pneg %p91
        %p192 = pneg %p88
        %p193 = pneg %p117
        %p194 = pneg %p114
        %s195 = sand.u32 %s104, 1
        %s196 = scalar_lea.sflag [#allocation4], %s195
        %s197 = sand.u32 %s104, 1
        %s198 = smul.addr %s197, 8
        %s199 = scalar_lea.vmem [#allocation3], %s198
        %s200 = smul.u32 %s20, 3
        %s201 = sadd.s32 %s200, %s21
        %p202 = scmp.lt.s32.totalorder %s201, 4
        %s203 = scalar_select %p202, %s201, 4
        %p204 = scmp.lt.s32.totalorder %s203, 4
        %s205 = scalar_select %p204, %s203, 4
        %s206 = smul.addr %s205, 8
        %s207 = scalar_lea.vmem %s0, %s206
        %s208 = smul.u32 %s20, 3
        %s209 = sadd.s32 %s208, %s21
        %p210 = scmp.lt.s32.totalorder %s209, 4
        %s211 = scalar_select %p210, %s209, 4
        %s212 = smul.u32 %s20, 3
        %s213 = sadd.s32 %s212, %s21
        %p214 = scmp.lt.s32.totalorder %s213, 4
        %s215 = scalar_select %p214, %s213, 4
        %p216 = scmp.lt.s32.totalorder %s215, 4
        %s217 = scalar_select %p216, %s215, 4
        %s218 = smul.addr %s217, 8
        %s219 = scalar_lea.vmem %s1, %s218
        %s220 = smul.u32 %s20, 3
        %s221 = sadd.s32 %s220, %s21
        %p222 = scmp.lt.s32.totalorder %s221, 4
        %s223 = scalar_select %p222, %s221, 4
        %p224 = scmp.eq.s32.totalorder %s21, 0
        // Predicated region
        $region29: #{tpu_custom_call.1} parent=27 // pred_check
          %p225 = pneg %p224
        $region30: #{tpu_custom_call.1} parent=27 // pred_check_branch
          %227 = sbr.rel (%p225) target = $region32
        $region31: #{tpu_custom_call.1} parent=27 // pred_region
          %vm228 = vcmask 0
          %229 = vst.msk [vmem:[#allocation2] sm:$0x1] %vm228, 0.0
        $region32: #{tpu_custom_call.1} parent=27 // pred_fallthru
          _
        %v230 = vld [vmem:[%s207] sm:$0xff]
        %vm231 = vcmask 80896
        %v232 = vsel %vm231, %v230, -inf
        %233 = vmax.xlane.f32.xlu0 %v232
        %v234 = vpop.xlane.xlu0 %233
        %v235 = vsub.f32 %v230, %v234
        %v236 = vmul.f32 %v235, 1.442695
        %v237 = vpow.pop %v236
        %v238 = vsel %vm231, %v237, 0.0
        %239 = vadd.xlane.f32.xlu0 %v238
        %v240 = vpop.xlane.xlu0 %239
        %v241 = vlog2.pop %v240
        %v242 = vmul.f32 %v241, 0.6931472
        %v243 = vsub.f32 %v235, %v242
        %v244 = vmax.f32 %v243, -16.118095
        %v245 = vsel %vm231, %v244, 0.0
        %246 = vadd.xlane.f32.xlu0 %v245
        %v247 = vpop.xlane.xlu0 %246
        %v248 = vsub.f32 0.0, %v242
        %v249 = vmax.f32 %v248, -16.118095
        %v250 = vld [vmem:[%s219] sm:$0xff]
        %v251 = vlaneseq
        %v252 = vand.u32 %v251, 127
        %253 = vset.pattern.permute.xlu0 0
        %254 = vperm.xlu0 %253, %v250
        %v255 = vpop.permute.xlu0 %254
        %vm256 = vcmp.eq.s32.totalorder %v252, %v255
        %v257 = vsel %vm256, %v244, 0.0
        %v258 = vsel %vm231, %v257, 0.0
        %259 = vadd.xlane.f32.xlu0 %v258
        %v260 = vpop.xlane.xlu0 %259
        %v261 = vmul.f32 %v247, 0.0001
        %v262 = vmul.f32 %v260, 0.8
        %v263 = vmul.f32 %v249, 0.2
        %v264 = vadd.f32 %v262, %v263
        %v265 = vmul.f32 %v264, 0.9999
        %v266 = vadd.f32 %v261, %v265
        %v267 = vsub.f32 0.0, %v266
        %s268 = smul.u32 %s20, 3
        %s269 = sadd.s32 %s268, %s21
        %s270 = smul.u32 %s269, 8
        %v271 = vlaneseq
        %v272 = vshrl.u32 %v271, 7
        %v273 = vstv %s270
        %v274 = vadd.s32 %v273, %v272
        %vm275 = vcmp.lt.s32.totalorder %v274, 37
        %v276 = vsel %vm275, %v267, 0.0
        %v277 = vld [vmem:[#allocation2] sm:$0x1]
        %v278 = vrot.slane %v276, 4
        %v279 = vadd.f32 %v276, %v278
        %v280 = vrot.slane %v279, 2
        %v281 = vadd.f32 %v279, %v280
        %v282 = vrot.slane %v281, 1
        %v283 = vadd.f32 %v281, %v282
        %v284 = vadd.f32 %v277, %v283
        %vm285 = vcmask 0
        %286 = vst.msk [vmem:[#allocation2] sm:$0x1] %vm285, %v284
        %p287 = scmp.eq.s32.totalorder %s21, 2
        // Predicated region
        $region33: #{tpu_custom_call.1} parent=27 // pred_check
          %p288 = pneg %p287
        $region34: #{tpu_custom_call.1} parent=27 // pred_check_branch
          %290 = sbr.rel (%p288) target = $region36
        $region35: #{tpu_custom_call.1} parent=27 // pred_region
          %v291 = vld [vmem:[#allocation2] sm:$0x1]
          %v293 = vlaneseq
          %v294 = vshrl.u32 %v293, 7
          %v295 = vsub.s32 0, %v294
          %v296 = vrot.slane %v291, %v295
          %297 = vset.pattern.permute.xlu0 0
          %298 = vperm.xlu0 %297, %v296
          %v299 = vpop.permute.xlu0 %298
          %301 = vst [vmem:[%s199] sm:$0xff] %v299
        $region36: #{tpu_custom_call.1} parent=27 // pred_fallthru
          _
        %s302 = sand.u32 %s104, 1
        %s303 = scalar_lea.sflag [#allocation4], %s302
        %s304 = sand.u32 %s104, 1
        %s305 = smul.addr %s304, 8
        %s306 = scalar_lea.vmem [#allocation3], %s305
        // Predicated region
        $region37: #{tpu_custom_call.1} parent=27 // pred_check
          %p307 = pneg %p114
        $region38: #{tpu_custom_call.1} parent=27 // pred_check_branch
          %309 = sbr.rel (%p307) target = $region40
        $region39: #{tpu_custom_call.1} parent=27 // pred_region
          %s311 = ssub.s32 128, 128
          %312 = vsyncadd %s303, %s311
          %s313 = smul.addr %s20, 128
          %s314 = scalar_lea.hbm %s2, %s313
          %s316 = sshll.u32 %s306, 4
          %s317 = int_to_ptr.vmem [resolvable:$true] %s316
          %319 = dma.vmem_to_hbm [thread:$0]  %s317, 128, %s314, %s303
        $region40: #{tpu_custom_call.1} parent=27 // pred_fallthru
          _
      $region28: #{tpu_custom_call.1} parent=5 // pred_fallthru
        _
      %p320 = scmp.le.s32.totalorder 2, %s11
      // Predicated region
      $region41: #{tpu_custom_call.1} parent=5 // pred_check
        %p321 = pneg %p320
      $region42: #{tpu_custom_call.1} parent=5 // pred_check_branch
        %323 = sbr.rel (%p321) target = $region44
      $region43: #{tpu_custom_call.1} parent=5 // pred_region
        %s324 = ssub.s32 %s11, 2
        // Predicated region
        $region45: #{tpu_custom_call.1} parent=43 // pred_check
          %p325 = pneg %p120
        $region46: #{tpu_custom_call.1} parent=43 // pred_check_branch
          %327 = sbr.rel (%p325) target = $region48
        $region47: #{tpu_custom_call.1} parent=43 // pred_region
          %s328 = sand.u32 %s105, 1
          %s329 = scalar_lea.sflag [#allocation4], %s328
          %s330 = sand.u32 %s105, 1
          %s331 = smul.addr %s330, 8
          %s332 = scalar_lea.vmem [#allocation3], %s331
          %333 = dma.done %s329, 128
        $region48: #{tpu_custom_call.1} parent=43 // pred_fallthru
          _
      $region44: #{tpu_custom_call.1} parent=5 // pred_fallthru
        _
    $region6: #{tpu_custom_call.1} parent=1 // loop_footer
      %s15 = sadd.s32 1, %s11
    $region7: #{tpu_custom_call.1} parent=1 // loop_footer_branch
      %10 = sbr.rel target = $region3
    $region8: #{tpu_custom_call.1} parent=1 // loop_exit
      _
    %334 = vsyncpa [#allocation4], 1
    %s335 = scalar_lea.sflag [#allocation4], 1
    %336 = vsyncpa %s335, 1

</llo_original>
